<compile_context>
chip_gen: v7x
topology: tpu7x:2x2x1
jax: 0.10.0
libtpu: 0.0.40
codegen_flags: <defaults>
</compile_context>

<pallas_src>
import functools

import jax
import jax.numpy as jnp
from jax import lax
from jax.experimental import pallas as pl
from jax.experimental.pallas import tpu as pltpu

EPS = 1e-5                     # PyTorch BatchNorm1d default
LANES = 128                    # vreg lane width
SUBLANES = 8                   # f32 sublane count
SINGLE_PASS_MAX_ELEMS = 128 * 1024   # <= 512 KiB of data -> fused single kernel
TILE_ROWS = 8192               # (8192, 128) f32 = 4 MiB per block (large-n path)


# --------------------------------------------------------------------------- #
# Fused single-pass kernel (batch resident in VMEM)
# --------------------------------------------------------------------------- #
def _fused_kernel(x_ref, w_ref, gamma_ref, beta_ref, o_ref, *, n):
    x = x_ref[...]                          # (1, n) f32, whole batch in VMEM
    w = w_ref[0, 0]
    g = gamma_ref[0, 0]
    be = beta_ref[0, 0]

    inv_n = jnp.float32(1.0 / n)
    mean_x = jnp.sum(x) * inv_n
    centered = x - mean_x
    var_x = jnp.sum(centered * centered) * inv_n     # centered two-pass variance

    # Fold Linear(1,1) + BatchNorm1d(1): the linear bias cancels in (y - mean_y).
    inv_std = lax.rsqrt(w * w * var_x + EPS)
    scale = g * w * inv_std
    shift = be - scale * mean_x
    o_ref[...] = x * scale + shift


def _forward_fused(x_row, n, w, gamma, beta):
    out_row = pl.pallas_call(
        functools.partial(_fused_kernel, n=n),
        out_shape=jax.ShapeDtypeStruct((1, n), jnp.float32),
        in_specs=[
            pl.BlockSpec(memory_space=pltpu.MemorySpace.VMEM),   # x (1, n)
            pl.BlockSpec(memory_space=pltpu.MemorySpace.SMEM),   # w (1, 1)
            pl.BlockSpec(memory_space=pltpu.MemorySpace.SMEM),   # gamma (1, 1)
            pl.BlockSpec(memory_space=pltpu.MemorySpace.SMEM),   # beta (1, 1)
        ],
        out_specs=pl.BlockSpec(memory_space=pltpu.MemorySpace.VMEM),
    )(x_row, w, gamma, beta)
    return out_row.reshape(n, 1)


# --------------------------------------------------------------------------- #
# Tiled two-pass kernels (large batches)
# --------------------------------------------------------------------------- #
def _stats_kernel(x_ref, sum_ref, sq_ref, *, total_rows, tile_rows):
    """Per-tile partial sums: (1, 8, 128) lane/sublane partials, parallel-safe."""
    i = pl.program_id(0)
    rows_valid = jnp.minimum(jnp.int32(total_rows) - i * tile_rows, tile_rows)
    row_ids = lax.broadcasted_iota(jnp.int32, (tile_rows, LANES), 0)
    x = jnp.where(row_ids < rows_valid, x_ref[...], 0.0)     # mask OOB rows of last block
    xg = x.reshape(tile_rows // SUBLANES, SUBLANES, LANES)
    sum_ref[...] = jnp.sum(xg, axis=0, keepdims=True)        # (1, 8, 128)
    sq_ref[...] = jnp.sum(xg * xg, axis=0, keepdims=True)


def _normalize_kernel(coef_ref, x_ref, o_ref):
    """out = x * scale + shift (Linear + BN fused FMA); OOB stores auto-masked."""
    o_ref[...] = x_ref[...] * coef_ref[0] + coef_ref[1]


def _forward_tiled(x_flat, n, w, gamma, beta):
    total_rows = -(-n // LANES)
    padded = total_rows * LANES
    if padded != n:
        # TODO(synk): ragged n pays one pad copy here; a fully zero-copy variant
        # would keep the flat buffer and also mask the ragged lane tail in-kernel.
        x_flat = jnp.pad(x_flat, (0, padded - n))
    x2d = x_flat.reshape(total_rows, LANES)        # free when n % 128 == 0

    tile_rows = max(min(TILE_ROWS, (total_rows // SUBLANES) * SUBLANES), SUBLANES)
    num_tiles = -(-total_rows // tile_rows)

    cparams = pltpu.CompilerParams(
        dimension_semantics=("parallel",),
        vmem_limit_bytes=32 * 1024 * 1024,
    )

    # -------- pass 1: per-tile partial (sum, sumsq), megacore-splittable ------
    psum, psq = pl.pallas_call(
        functools.partial(_stats_kernel, total_rows=total_rows, tile_rows=tile_rows),
        out_shape=(
            jax.ShapeDtypeStruct((num_tiles, SUBLANES, LANES), jnp.float32),
            jax.ShapeDtypeStruct((num_tiles, SUBLANES, LANES), jnp.float32),
        ),
        grid=(num_tiles,),
        in_specs=[pl.BlockSpec((tile_rows, LANES), lambda i: (i, 0))],
        out_specs=(
            pl.BlockSpec((1, SUBLANES, LANES), lambda i: (i, 0, 0)),
            pl.BlockSpec((1, SUBLANES, LANES), lambda i: (i, 0, 0)),
        ),
        compiler_params=cparams,
    )(x2d)

    # tiny tree-reduction of partials + Linear/BN fold -> (scale, shift)
    inv_n = jnp.float32(1.0 / n)
    mean_x = jnp.sum(psum) * inv_n
    var_x = jnp.maximum(jnp.sum(psq) * inv_n - mean_x * mean_x, 0.0)
    w_s, g_s, b_s = w[0, 0], gamma[0, 0], beta[0, 0]
    inv_std = lax.rsqrt(w_s * w_s * var_x + EPS)
    scale = g_s * w_s * inv_std
    shift = b_s - scale * mean_x
    coeffs = jnp.stack([scale, shift]).astype(jnp.float32)   # (2,)

    # -------- pass 2: elementwise FMA over lane-dense tiles -------------------
    out2d = pl.pallas_call(
        _normalize_kernel,
        out_shape=jax.ShapeDtypeStruct((total_rows, LANES), jnp.float32),
        grid=(num_tiles,),
        in_specs=[
            pl.BlockSpec(memory_space=pltpu.MemorySpace.SMEM),     # coeffs (2,)
            pl.BlockSpec((tile_rows, LANES), lambda i: (i, 0)),    # x tile
        ],
        out_specs=pl.BlockSpec((tile_rows, LANES), lambda i: (i, 0)),
        compiler_params=cparams,
    )(coeffs, x2d)

    out_flat = out2d.reshape(-1)
    if padded != n:
        out_flat = out_flat[:n]
    return out_flat.reshape(n, 1)


# --------------------------------------------------------------------------- #
# Public forward + reference
# --------------------------------------------------------------------------- #
def example_model_forward(imgs, w, b, gamma, beta):
    """imgs: (N, 1) f32; w, b, gamma, beta: (1, 1) f32. Returns (N, 1) f32."""
    n, f = imgs.shape
    assert f == 1, "ExampleModel operates on a single feature"
    del b  # the Linear bias cancels exactly inside BatchNorm's (y - mean_y)
    if imgs.dtype != jnp.float32:
        imgs = imgs.astype(jnp.float32)
    if n <= SINGLE_PASS_MAX_ELEMS:
        return _forward_fused(imgs.reshape(1, n), n, w, gamma, beta)
    return _forward_tiled(imgs.reshape(-1), n, w, gamma, beta)


def reference_forward(imgs, w, b, gamma, beta):
    """Pure-JAX reference with identical (training-mode) semantics."""
    y = imgs * w[0, 0] + b[0, 0]
    mean = jnp.mean(y, axis=0, keepdims=True)
    var = jnp.mean((y - mean) ** 2, axis=0, keepdims=True)
    return gamma[0, 0] * (y - mean) / jnp.sqrt(var + EPS) + beta[0, 0]


if __name__ == "__main__":
    key = jax.random.PRNGKey(0)
    k_x, k_w, k_b, k_x2 = jax.random.split(key, 4)

    # Shapes consistent with ExampleModel: batch = 8, features = 1.
    imgs = jax.random.normal(k_x, (8, 1), dtype=jnp.float32)

    # nn.Linear(1,1)-style init; BatchNorm1d defaults (gamma=1, beta=0).
    w = jax.random.uniform(k_w, (1, 1), jnp.float32, minval=-1.0, maxval=1.0)
    b = jax.random.uniform(k_b, (1, 1), jnp.float32, minval=-1.0, maxval=1.0)
    gamma = jnp.ones((1, 1), dtype=jnp.float32)
    beta = jnp.zeros((1, 1), dtype=jnp.float32)

    out = jax.block_until_ready(example_model_forward(imgs, w, b, gamma, beta))
    ref = reference_forward(imgs, w, b, gamma, beta)
    assert out.shape == (8, 1)
    assert jnp.allclose(out, ref, atol=1e-4, rtol=1e-4), "fused path mismatch"

    # Also exercise the tiled two-pass (large-batch) path at a still-small size,
    # including a ragged tail (1283 % 128 != 0), so both paths are proven on TPU.
    imgs2 = jax.random.normal(k_x2, (1283, 1), dtype=jnp.float32) * 2.0 + 0.5
    out2 = jax.block_until_ready(
        _forward_tiled(imgs2.reshape(-1), imgs2.shape[0], w, gamma, beta))
    ref2 = reference_forward(imgs2, w, b, gamma, beta)
    assert out2.shape == (1283, 1)
    assert jnp.allclose(out2, ref2, atol=1e-4, rtol=1e-4), "tiled path mismatch"

    print("KERNEL_OK")
</pallas_src>

<mosaic_0001>
module attributes {stable_mosaic.version = 11 : i64} {
  func.func @_fused_kernel(%arg0: memref<1x8xf32, #tpu.memory_space<vmem>>, %arg1: memref<1x1xf32, #tpu.memory_space<smem>>, %arg2: memref<1x1xf32, #tpu.memory_space<smem>>, %arg3: memref<1x1xf32, #tpu.memory_space<smem>>, %arg4: memref<1x8xf32, #tpu.memory_space<vmem>>) attributes {dimension_semantics = [], scalar_prefetch = 0 : i64, scratch_operands = 0 : i64, tpu.core_type = #tpu.core_type<tc>} {
    %c0 = arith.constant 0 : index
    %c0_0 = arith.constant 0 : index
    %0 = vector.load %arg0[%c0, %c0_0] : memref<1x8xf32, #tpu.memory_space<vmem>>, vector<1x8xf32>
    %c0_1 = arith.constant 0 : index
    %c0_2 = arith.constant 0 : index
    %1 = memref.load %arg1[%c0_1, %c0_2] : memref<1x1xf32, #tpu.memory_space<smem>>
    %c0_3 = arith.constant 0 : index
    %c0_4 = arith.constant 0 : index
    %2 = memref.load %arg2[%c0_3, %c0_4] : memref<1x1xf32, #tpu.memory_space<smem>>
    %c0_5 = arith.constant 0 : index
    %c0_6 = arith.constant 0 : index
    %3 = memref.load %arg3[%c0_5, %c0_6] : memref<1x1xf32, #tpu.memory_space<smem>>
    %4 = vector.shape_cast %0 : vector<1x8xf32> to vector<1x1x8xf32>
    %cst = arith.constant dense<0.000000e+00> : vector<1xf32>
    %5 = vector.multi_reduction <add>, %4, %cst [1, 2] : vector<1x1x8xf32> to vector<1xf32>
    %6 = vector.shape_cast %5 : vector<1xf32> to vector<1x1x1xf32>
    %7 = vector.extract %6[0, 0, 0] : f32 from vector<1x1x1xf32>
    %cst_7 = arith.constant 1.250000e-01 : f32
    %8 = arith.mulf %7, %cst_7 : f32
    %9 = vector.broadcast %8 : f32 to vector<1x8xf32>
    %10 = arith.subf %0, %9 : vector<1x8xf32>
    %11 = arith.mulf %10, %10 : vector<1x8xf32>
    %12 = vector.shape_cast %11 : vector<1x8xf32> to vector<1x1x8xf32>
    %cst_8 = arith.constant dense<0.000000e+00> : vector<1xf32>
    %13 = vector.multi_reduction <add>, %12, %cst_8 [1, 2] : vector<1x1x8xf32> to vector<1xf32>
    %14 = vector.shape_cast %13 : vector<1xf32> to vector<1x1x1xf32>
    %15 = vector.extract %14[0, 0, 0] : f32 from vector<1x1x1xf32>
    %cst_9 = arith.constant 1.250000e-01 : f32
    %16 = arith.mulf %15, %cst_9 : f32
    %17 = arith.mulf %1, %1 : f32
    %18 = arith.mulf %17, %16 : f32
    %cst_10 = arith.constant 9.99999974E-6 : f32
    %19 = arith.addf %18, %cst_10 : f32
    %20 = math.rsqrt %19 : f32
    %21 = arith.mulf %2, %1 : f32
    %22 = arith.mulf %21, %20 : f32
    %23 = arith.mulf %22, %8 : f32
    %24 = arith.subf %3, %23 : f32
    %25 = vector.broadcast %22 : f32 to vector<1x8xf32>
    %26 = arith.mulf %0, %25 : vector<1x8xf32>
    %27 = vector.broadcast %24 : f32 to vector<1x8xf32>
    %28 = arith.addf %26, %27 : vector<1x8xf32>
    %c0_11 = arith.constant 0 : index
    %c0_12 = arith.constant 0 : index
    %29 = vector.load %arg4[%c0_11, %c0_12] : memref<1x8xf32, #tpu.memory_space<vmem>>, vector<1x8xf32>
    tpu.vector_store %arg4[%c0_11, %c0_12], %28 {strides = array<i32>} : memref<1x8xf32, #tpu.memory_space<vmem>>, vector<1x8xf32>,
    return
  }
}

</mosaic_0001>

<llo_original>
// kernel: tpu_custom_call.1
$region0: #{tpu_custom_call.1}
  #allocation0 [shape = 'u32[]', space=smem, size = 0x4, offset = 0x4, fixed_abs, tag = 'smem constant byte address 0x4 - core index']
  #allocation1 [shape = 'u32[144,128]{1,0:T(1,128)}', space=vmem, size = 0x12000, scoped, tag = 'internal scratch']
  #allocation2 [shape = 'f32[1,1]{1,0:T(1,128)S(6)}', space=smem, size = 0x200, scoped, tag = 'scoped memory for tpu_custom_call.1']
  #allocation3 [shape = 'f32[1,1]{1,0:T(1,128)S(6)}', space=smem, size = 0x200, scoped, tag = 'scoped memory for tpu_custom_call.1']
  #allocation4 [shape = 'f32[1,1]{1,0:T(1,128)S(6)}', space=smem, size = 0x200, scoped, tag = 'scoped memory for tpu_custom_call.1']
  %s0 = inlined_call_operand.vmem [shape: f32[1,8], index: 0, kind: input, shape index: {}]
  %s1 = inlined_call_operand.<no memory space> [shape: f32[1,1], index: 1, kind: input, shape index: {}]
  %s2 = inlined_call_operand.<no memory space> [shape: f32[1,1], index: 2, kind: input, shape index: {}]
  %s3 = inlined_call_operand.<no memory space> [shape: f32[1,1], index: 3, kind: input, shape index: {}]
  %s4 = inlined_call_operand.hbm [shape: f32[1,8], index: 4, kind: output, shape index: {}]
  %s5 = sld [smem:[#allocation0]]
  $region26: #{tpu_custom_call.1} parent=0
    _
  %s7 = ssub.s32 1, %s5
  %s8 = scalar_select 0, %s7, %s5
  %9 = sst [smem:[#allocation2]] %s1
  %10 = sst [smem:[#allocation3]] %s2
  %11 = sst [smem:[#allocation4]] %s3
  $region1: #{tpu_custom_call.1} parent=0
    #allocation5 [shape = 'u8[512]{0}', space=vmem, size = 0x400, scoped, tag = 'output window, operand 0, single buffered']
    #allocation6 [shape = 's32[1]{0}', space=sflag, size = 0x4, scoped, tag = 'scoped memory for tpu_custom_call.1']
    %12 = vsyncpa [#allocation6], 0
    // Predicated region
    $region2: #{tpu_custom_call.1} parent=1 // pred_check
      _
    $region3: #{tpu_custom_call.1} parent=1 // pred_check_branch
      %14 = sbr.rel (0) target = $region5
    $region4: #{tpu_custom_call.1} parent=1 // pred_region
      _
    $region5: #{tpu_custom_call.1} parent=1 // pred_fallthru
      _
    // Predicated region
    $region6: #{tpu_custom_call.1} parent=1 // pred_check
      _
    $region7: #{tpu_custom_call.1} parent=1 // pred_check_branch
      %16 = sbr.rel (0) target = $region9
    $region8: #{tpu_custom_call.1} parent=1 // pred_region
      _
    $region9: #{tpu_custom_call.1} parent=1 // pred_fallthru
      _
    // Predicated region
    $region10: #{tpu_custom_call.1} parent=1 // pred_check
      _
    $region11: #{tpu_custom_call.1} parent=1 // pred_check_branch
      %18 = sbr.rel (0) target = $region13
    $region12: #{tpu_custom_call.1} parent=1 // pred_region
      _
    $region13: #{tpu_custom_call.1} parent=1 // pred_fallthru
      _
    // Predicated region
    $region14: #{tpu_custom_call.1} parent=1 // pred_check
      _
    $region15: #{tpu_custom_call.1} parent=1 // pred_check_branch
      %20 = sbr.rel (0) target = $region17
    $region16: #{tpu_custom_call.1} parent=1 // pred_region
      _
    $region17: #{tpu_custom_call.1} parent=1 // pred_fallthru
      _
    %v21 = vld [vmem:[%s0] sm:$0x1]
    %s22 = sld [smem:[#allocation2]]
    %s23 = sld [smem:[#allocation3]]
    %s24 = sld [smem:[#allocation4]]
    %vm25 = vcmask 57344
    %v26 = vsel %vm25, %v21, 0.0
    %27 = vadd.xlane.f32.xlu0 %v26
    %v28 = vpop.xlane.xlu0 %27
    %v29 = vrot.slane %v28, 4
    %v30 = vadd.f32 %v28, %v29
    %v31 = vrot.slane %v30, 2
    %v32 = vadd.f32 %v30, %v31
    %v33 = vrot.slane %v32, 1
    %v34 = vadd.f32 %v32, %v33
    %s35 = vtos %v34
    %s36 = smul.f32 %s35, 0.125
    %v37 = vstv %s36
    %v38 = vsub.f32 %v21, %v37
    %v39 = vmul.f32 %v38, %v38
    %v40 = vsel %vm25, %v39, 0.0
    %41 = vadd.xlane.f32.xlu0 %v40
    %v42 = vpop.xlane.xlu0 %41
    %v43 = vrot.slane %v42, 4
    %v44 = vadd.f32 %v42, %v43
    %v45 = vrot.slane %v44, 2
    %v46 = vadd.f32 %v44, %v45
    %v47 = vrot.slane %v46, 1
    %v48 = vadd.f32 %v46, %v47
    %s49 = vtos %v48
    %s50 = smul.f32 %s49, 0.125
    %s51 = smul.f32 %s22, %s22
    %s52 = smul.f32 %s51, %s50
    %s53 = sadd.f32 %s52, 1e-05
    %v54 = vstv %s53
    %v55 = vrsqrt.pop %v54
    %s56 = vtos %v55
    %s57 = smul.f32 %s23, %s22
    %s58 = smul.f32 %s57, %s56
    %s59 = smul.f32 %s58, %s36
    %s60 = ssub.f32 %s24, %s59
    %v61 = vstv %s58
    %v62 = vmul.f32 %v21, %v61
    %v63 = vstv %s60
    %v64 = vadd.f32 %v62, %v63
    %65 = vst.msk [vmem:[#allocation5] sm:$0x1] %vm25, %v64
    // Predicated region
    $region18: #{tpu_custom_call.1} parent=1 // pred_check
      _
    $region19: #{tpu_custom_call.1} parent=1 // pred_check_branch
      %67 = sbr.rel (0) target = $region21
    $region20: #{tpu_custom_call.1} parent=1 // pred_region
      %s69 = ssub.s32 16, 16
      %70 = vsyncadd [#allocation6], %s69
      %s72 = sshll.u32 [#allocation5], 4
      %s73 = int_to_ptr.vmem [resolvable:$true] %s72
      %75 = dma.vmem_to_hbm [thread:$0]  %s73, 16, %s4, [#allocation6]
    $region21: #{tpu_custom_call.1} parent=1 // pred_fallthru
      _
    // Predicated region
    $region22: #{tpu_custom_call.1} parent=1 // pred_check
      _
    $region23: #{tpu_custom_call.1} parent=1 // pred_check_branch
      %77 = sbr.rel (0) target = $region25
    $region24: #{tpu_custom_call.1} parent=1 // pred_region
      %78 = dma.done [#allocation6], 16
    $region25: #{tpu_custom_call.1} parent=1 // pred_fallthru
      _
    %79 = vsyncpa [#allocation6], 1

</llo_original>
